<compile_context>
chip_gen: v7x
topology: tpu7x:2x2x1
jax: 0.10.0
libtpu: 0.0.40
codegen_flags: <defaults>
</compile_context>

<pallas_src>
import functools

import jax
import jax.numpy as jnp
from jax import lax
from jax.experimental import pallas as pl
from jax.experimental.pallas import tpu as pltpu


# ---------------------------------------------------------------------------
# Constants from the PyTorch module.
_A1 = 0.2767710722767271
_A2 = -0.4151510464222559
_B = 0.20196397432171373
_C1 = 1.0151378214411042
_C2 = 1.550069351372668

# Folded tail: a1*v1*(erf(B*v1)+c1) + a2*v1*(erf(B*v1)+c2) = v1*(A*erf(B*v1)+C).
# (v2..v6 in the PyTorch forward do not feed the returned value.)
_A = _A1 + _A2
_C = _A1 * _C1 + _A2 * _C2

# tanh-form erf (EUP path):  erf(x) ~= tanh(x*(k1 + x^2*(k3 + x^2*(k5 + x^2*k7))))
# Coefficients = Taylor expansion of atanh(erf(x)).  |err| <~ 2e-5 for |x| <= 1,
# <~ 3e-4 for |x| <= 3; arguments here are B*v1 with B ~ 0.2, so |x| is small.
_K1 = 1.1283791670955126
_K3 = 0.1027726023
_K5 = -0.000209194
_K7 = -0.000590109


def _erf_tanh(x):
    # Clamp: beyond |x|=3 erf is saturated and the truncated poly would misbehave.
    x = jnp.clip(x, -3.0, 3.0)
    x2 = x * x
    g = x * (_K1 + x2 * (_K3 + x2 * (_K5 + x2 * _K7)))
    return jnp.tanh(g)  # tanh -> EUP slot, frees the VALU


def _fused_conv1x1_kernel(x_ref, w_ref, b_ref, o_ref, *, approx_erf):
    # x_ref: (C_in, TILE_M)   w_ref: (C_out, C_in)   b_ref: (C_out, 1)
    # o_ref: (C_out, TILE_M)
    c_in = x_ref.shape[0]

    # 1x1 conv as unrolled rank-1 VPU FMAs (K=2; MXU would pad K -> 128/256).
    v1 = w_ref[:, 0:1] * x_ref[0:1, :] + b_ref[...]
    for c in range(1, c_in):
        v1 = v1 + w_ref[:, c : c + 1] * x_ref[c : c + 1, :]

    if approx_erf:
        erf_bv1 = _erf_tanh(_B * v1)        # EUP transcendental
    else:
        erf_bv1 = lax.erf(_B * v1)          # exact (VPU polynomial)

    # Folded elementwise tail.
    o_ref[...] = (v1 * (_A * erf_bv1 + _C)).astype(o_ref.dtype)


# Lane-aligned spatial tile candidates (review item 1): big tiles amortize the
# ~0.35 us per-grid-step overhead; 32768 keeps the double-buffered working set
# (~10 MiB at C_out=35) inside every generation's VMEM budget.
_TILE_CANDIDATES = (32768, 16384, 8192, 4096, 2048, 1024, 512, 256, 128)


def _pick_tile_m(hw, n):
    """Pick a lane-aligned spatial tile for a cdiv grid."""
    if hw <= 128:
        # Toy sizes: single full-extent block (block dims == array dims).
        return hw
    hw_pad = -(-hw // 128) * 128
    tile_m = 128
    for cand in _TILE_CANDIDATES:
        if cand <= hw_pad:
            tile_m = cand
            break
    # v7x megacore (review item 4): ensure >=2 parallel blocks when possible so
    # both TensorCores get work (only matters when N*num_m_blocks would be 1).
    while n * (-(-hw // tile_m)) < 2 and tile_m > 128:
        tile_m //= 2
    return tile_m


def fused_model(x_nchw, weight, bias, *, approx_erf=False):
    """x_nchw: (N, C_in, H, W); weight: (C_out, C_in, 1, 1); bias: (C_out,).

    approx_erf=True routes the transcendental to the EUP (tanh-form erf);
    default False preserves the original module's exact-erf numerics.
    """
    N, C_in, H, W = x_nchw.shape
    C_out = weight.shape[0]
    HW = H * W

    # Pure reshapes — no transposes.
    x3 = x_nchw.reshape(N, C_in, HW)          # (N, C_in, M)
    w_mat = weight.reshape(C_out, C_in)       # (C_out, C_in)
    b_col = bias.reshape(C_out, 1)            # (C_out, 1)

    tile_m = _pick_tile_m(HW, N)
    grid = (N, pl.cdiv(HW, tile_m))           # cdiv grid: ragged last block OK

    kernel = functools.partial(_fused_conv1x1_kernel, approx_erf=approx_erf)

    out3 = pl.pallas_call(
        kernel,
        out_shape=jax.ShapeDtypeStruct((N, C_out, HW), jnp.float32),
        grid=grid,
        in_specs=[
            # x: tile the spatial (lane) axis; batch dim squeezed out.
            pl.BlockSpec((None, C_in, tile_m), lambda n, m: (n, 0, m)),
            # weight & bias stay resident in VMEM across the grid.
            pl.BlockSpec((C_out, C_in), lambda n, m: (0, 0)),
            pl.BlockSpec((C_out, 1), lambda n, m: (0, 0)),
        ],
        out_specs=pl.BlockSpec((None, C_out, tile_m), lambda n, m: (n, 0, m)),
        compiler_params=pltpu.CompilerParams(
            # Both axes are pure data-parallel -> megacore can shard them.
            dimension_semantics=("parallel", "parallel"),
            # Headroom for 32K-wide double-buffered blocks on v5e's 16 MiB
            # scoped default; well under physical VMEM on every generation.
            vmem_limit_bytes=32 * 1024 * 1024,
        ),
    )(x3, w_mat, b_col)

    return out3.reshape(N, C_out, H, W)


def _reference(x_nchw, weight, bias):
    """Pure-JAX reference of the ORIGINAL (unfolded) module math."""
    C_out, C_in = weight.shape[0], weight.shape[1]
    v1 = (jnp.einsum("nchw,oc->nohw", x_nchw, weight.reshape(C_out, C_in))
          + bias.reshape(1, C_out, 1, 1))
    v7 = v1 * _A1
    v8 = v1 * _B
    v9 = lax.erf(v8)
    v10 = v9 + _C1
    v11 = v7 * v10
    v12 = v1 * _A2
    v13 = lax.erf(v8)
    v14 = v13 + _C2
    v15 = v12 * v14
    return v11 + v15                           # v2..v6 are dead in the module


if __name__ == "__main__":
    key = jax.random.PRNGKey(0)
    k_x, k_w, k_b, k_x2 = jax.random.split(key, 4)

    # Shapes implied by the module: x1 = (1, 2, 6, 6), Conv2d(2, 35, 1)
    N, C_in, H, W = 1, 2, 6, 6
    C_out = 35

    x1 = jax.random.normal(k_x, (N, C_in, H, W), dtype=jnp.float32)
    # Deterministic synthetic parameters (PyTorch-style uniform(-1/sqrt(fan_in), ...))
    fan_in = C_in * 1 * 1
    bound = 1.0 / (fan_in ** 0.5)
    weight = jax.random.uniform(k_w, (C_out, C_in, 1, 1), dtype=jnp.float32,
                                minval=-bound, maxval=bound)
    bias = jax.random.uniform(k_b, (C_out,), dtype=jnp.float32,
                              minval=-bound, maxval=bound)

    ref = _reference(x1, weight, bias)

    # --- default (exact-erf) path: preserves the module's forward semantics ---
    out = fused_model(x1, weight, bias)
    jax.block_until_ready(out)
    assert out.shape == (N, C_out, H, W)
    assert jnp.allclose(out, ref, atol=1e-5, rtol=1e-5)

    # --- opt-in EUP (tanh-form erf) path: accuracy check requested by review ---
    out_approx = fused_model(x1, weight, bias, approx_erf=True)
    jax.block_until_ready(out_approx)
    assert jnp.allclose(out_approx, ref, atol=5e-4, rtol=5e-4)

    # --- larger, non-128-divisible spatial size: exercises the cdiv grid,
    #     multi-block tiling and the ragged (masked-writeback) last block ---
    N2, H2, W2 = 2, 50, 50                     # HW = 2500 -> tile_m = 2048
    x2 = jax.random.normal(k_x2, (N2, C_in, H2, W2), dtype=jnp.float32)
    out2 = fused_model(x2, weight, bias)
    jax.block_until_ready(out2)
    ref2 = _reference(x2, weight, bias)
    assert jnp.allclose(out2, ref2, atol=1e-5, rtol=1e-5)

    print("KERNEL_OK")
</pallas_src>

<mosaic_0001>
module attributes {stable_mosaic.version = 11 : i64} {
  func.func @_fused_conv1x1_kernel(%arg0: i32, %arg1: i32, %arg2: memref<1x2x36xf32, #tpu.memory_space<vmem>>, %arg3: memref<35x2xf32, #tpu.memory_space<vmem>>, %arg4: memref<35x1xf32, #tpu.memory_space<vmem>>, %arg5: memref<1x35x36xf32, #tpu.memory_space<vmem>>) attributes {dimension_semantics = [#tpu.dimension_semantics<parallel>, #tpu.dimension_semantics<parallel>], iteration_bounds = array<i64: 1, 1>, scalar_prefetch = 0 : i64, scratch_operands = 0 : i64, tpu.core_type = #tpu.core_type<tc>, window_params = [{transform_indices = @transform_0, window_bounds = array<i64: 1, 2, 36>}, {pipeline_mode = #tpu.pipeline_mode<synchronous>, transform_indices = @transform_1, window_bounds = array<i64: 35, 2>}, {pipeline_mode = #tpu.pipeline_mode<synchronous>, transform_indices = @transform_2, window_bounds = array<i64: 35, 1>}, {transform_indices = @transform_3, window_bounds = array<i64: 1, 35, 36>}]} {
    %c0 = arith.constant 0 : index
    %c0_0 = arith.constant 0 : index
    %0 = vector.load %arg3[%c0, %c0_0] : memref<35x2xf32, #tpu.memory_space<vmem>>, vector<35x1xf32>
    %c0_1 = arith.constant 0 : index
    %c0_2 = arith.constant 0 : index
    %c0_3 = arith.constant 0 : index
    %1 = vector.load %arg2[%c0_1, %c0_2, %c0_3] : memref<1x2x36xf32, #tpu.memory_space<vmem>>, vector<1x1x36xf32>
    %2 = vector.shape_cast %1 : vector<1x1x36xf32> to vector<1x36xf32>
    %3 = vector.broadcast %0 : vector<35x1xf32> to vector<35x36xf32>
    %4 = vector.broadcast %2 : vector<1x36xf32> to vector<35x36xf32>
    %5 = arith.mulf %3, %4 : vector<35x36xf32>
    %c0_4 = arith.constant 0 : index
    %c0_5 = arith.constant 0 : index
    %6 = vector.load %arg4[%c0_4, %c0_5] : memref<35x1xf32, #tpu.memory_space<vmem>>, vector<35x1xf32>
    %7 = vector.broadcast %6 : vector<35x1xf32> to vector<35x36xf32>
    %8 = arith.addf %5, %7 : vector<35x36xf32>
    %c0_6 = arith.constant 0 : index
    %c1 = arith.constant 1 : index
    %9 = vector.load %arg3[%c0_6, %c1] : memref<35x2xf32, #tpu.memory_space<vmem>>, vector<35x1xf32>
    %c0_7 = arith.constant 0 : index
    %c1_8 = arith.constant 1 : index
    %c0_9 = arith.constant 0 : index
    %10 = vector.load %arg2[%c0_7, %c1_8, %c0_9] : memref<1x2x36xf32, #tpu.memory_space<vmem>>, vector<1x1x36xf32>
    %11 = vector.shape_cast %10 : vector<1x1x36xf32> to vector<1x36xf32>
    %12 = vector.broadcast %9 : vector<35x1xf32> to vector<35x36xf32>
    %13 = vector.broadcast %11 : vector<1x36xf32> to vector<35x36xf32>
    %14 = arith.mulf %12, %13 : vector<35x36xf32>
    %15 = arith.addf %8, %14 : vector<35x36xf32>
    %cst = arith.constant 0.201963976 : f32
    %16 = vector.broadcast %cst : f32 to vector<35x36xf32>
    %17 = arith.mulf %16, %15 : vector<35x36xf32>
    %18 = math.erf %17 : vector<35x36xf32>
    %cst_10 = arith.constant -0.138379976 : f32
    %19 = vector.broadcast %cst_10 : f32 to vector<35x36xf32>
    %20 = arith.mulf %19, %18 : vector<35x36xf32>
    %cst_11 = arith.constant -0.362552136 : f32
    %21 = vector.broadcast %cst_11 : f32 to vector<35x36xf32>
    %22 = arith.addf %20, %21 : vector<35x36xf32>
    %23 = arith.mulf %15, %22 : vector<35x36xf32>
    %c0_12 = arith.constant 0 : index
    %c0_13 = arith.constant 0 : index
    %c0_14 = arith.constant 0 : index
    %24 = vector.load %arg5[%c0_12, %c0_13, %c0_14] : memref<1x35x36xf32, #tpu.memory_space<vmem>>, vector<1x35x36xf32>
    %25 = vector.shape_cast %24 : vector<1x35x36xf32> to vector<35x36xf32>
    %26 = vector.shape_cast %23 : vector<35x36xf32> to vector<1x35x36xf32>
    tpu.vector_store %arg5[%c0_12, %c0_13, %c0_14], %26 {strides = array<i32>} : memref<1x35x36xf32, #tpu.memory_space<vmem>>, vector<1x35x36xf32>,
    return
  }
  func.func @transform_0(%arg0: i32, %arg1: i32) -> (i32, i32, i32) {
    %c0_i32 = arith.constant 0 : i32
    %c0_i32_0 = arith.constant 0 : i32
    return %arg0, %c0_i32, %arg1 : i32, i32, i32
  }
  func.func @transform_1(%arg0: i32, %arg1: i32) -> (i32, i32) {
    %c0_i32 = arith.constant 0 : i32
    %c0_i32_0 = arith.constant 0 : i32
    %c0_i32_1 = arith.constant 0 : i32
    return %c0_i32, %c0_i32_0 : i32, i32
  }
  func.func @transform_2(%arg0: i32, %arg1: i32) -> (i32, i32) {
    %c0_i32 = arith.constant 0 : i32
    %c0_i32_0 = arith.constant 0 : i32
    %c0_i32_1 = arith.constant 0 : i32
    return %c0_i32, %c0_i32_0 : i32, i32
  }
  func.func @transform_3(%arg0: i32, %arg1: i32) -> (i32, i32, i32) {
    %c0_i32 = arith.constant 0 : i32
    %c0_i32_0 = arith.constant 0 : i32
    return %arg0, %c0_i32, %arg1 : i32, i32, i32
  }
}

</mosaic_0001>

<llo_original>
// kernel: tpu_custom_call.1
$region0: #{tpu_custom_call.1}
  #allocation0 [shape = 'u32[]', space=smem, size = 0x4, offset = 0x4, fixed_abs, tag = 'smem constant byte address 0x4 - core index']
  #allocation1 [shape = 'u32[144,128]{1,0:T(1,128)}', space=vmem, size = 0x12000, scoped, tag = 'internal scratch']
  %s0 = inlined_call_operand.vmem [shape: f32[1,2,36], index: 0, kind: input, shape index: {}]
  %s1 = inlined_call_operand.vmem [shape: f32[35,2], index: 1, kind: input, shape index: {}]
  %s2 = inlined_call_operand.vmem [shape: f32[35,1], index: 2, kind: input, shape index: {}]
  %s3 = inlined_call_operand.vmem [shape: f32[1,35,36], index: 3, kind: output, shape index: {}]
  %s4 = sld [smem:[#allocation0]]
  $region22: #{tpu_custom_call.1} parent=0
    _
  %s6 = ssub.s32 1, %s4
  %s7 = scalar_select 0, %s6, %s4
  // Predicated region
  $region2: #{tpu_custom_call.1} parent=0 // pred_check
    _
  $region3: #{tpu_custom_call.1} parent=0 // pred_check_branch
    %9 = sbr.rel (0) target = $region5
  $region4: #{tpu_custom_call.1} parent=0 // pred_region
    _
  $region5: #{tpu_custom_call.1} parent=0 // pred_fallthru
    _
  // Predicated region
  $region6: #{tpu_custom_call.1} parent=0 // pred_check
    _
  $region7: #{tpu_custom_call.1} parent=0 // pred_check_branch
    %11 = sbr.rel (0) target = $region9
  $region8: #{tpu_custom_call.1} parent=0 // pred_region
    _
  $region9: #{tpu_custom_call.1} parent=0 // pred_fallthru
    _
  // Predicated region
  $region10: #{tpu_custom_call.1} parent=0 // pred_check
    _
  $region11: #{tpu_custom_call.1} parent=0 // pred_check_branch
    %13 = sbr.rel (0) target = $region13
  $region12: #{tpu_custom_call.1} parent=0 // pred_region
    _
  $region13: #{tpu_custom_call.1} parent=0 // pred_fallthru
    _
  %v14 = vld [vmem:[%s1] sm:$0xff]
  %v15 = vld [vmem:[%s1 + $0x8] sm:$0xff]
  %v16 = vld [vmem:[%s1 + $0x10] sm:$0xff]
  %v17 = vld [vmem:[%s1 + $0x18] sm:$0xff]
  %v18 = vld [vmem:[%s1 + $0x20] sm:$0x7]
  %v19 = vld [vmem:[%s0] sm:$0x1]
  %21 = vset.pattern.permute.xlu0 0
  %22 = vperm.xlu0 %21, %v14
  %v23 = vpop.permute.xlu0 %22
  %26 = vset.pattern.permute.xlu0 0
  %27 = vperm.xlu0 %26, %v15
  %v28 = vpop.permute.xlu0 %27
  %31 = vset.pattern.permute.xlu0 0
  %32 = vperm.xlu0 %31, %v16
  %v33 = vpop.permute.xlu0 %32
  %36 = vset.pattern.permute.xlu0 0
  %37 = vperm.xlu0 %36, %v17
  %v38 = vpop.permute.xlu0 %37
  %41 = vset.pattern.permute.xlu0 0
  %42 = vperm.xlu0 %41, %v18
  %v43 = vpop.permute.xlu0 %42
  %v45 = vlaneseq
  %v46 = vshrl.u32 %v45, 7
  %v47 = vsub.s32 0, %v46
  %v48 = vrot.slane %v19, %v47
  %v49 = vmul.f32 %v23, %v48
  %v50 = vmul.f32 %v28, %v48
  %v51 = vmul.f32 %v33, %v48
  %v52 = vmul.f32 %v38, %v48
  %v53 = vmul.f32 %v43, %v48
  %v54 = vld [vmem:[%s2] sm:$0xff]
  %v55 = vld [vmem:[%s2 + $0x8] sm:$0xff]
  %v56 = vld [vmem:[%s2 + $0x10] sm:$0xff]
  %v57 = vld [vmem:[%s2 + $0x18] sm:$0xff]
  %v58 = vld [vmem:[%s2 + $0x20] sm:$0x7]
  %60 = vset.pattern.permute.xlu0 0
  %61 = vperm.xlu0 %60, %v54
  %v62 = vpop.permute.xlu0 %61
  %65 = vset.pattern.permute.xlu0 0
  %66 = vperm.xlu0 %65, %v55
  %v67 = vpop.permute.xlu0 %66
  %70 = vset.pattern.permute.xlu0 0
  %71 = vperm.xlu0 %70, %v56
  %v72 = vpop.permute.xlu0 %71
  %75 = vset.pattern.permute.xlu0 0
  %76 = vperm.xlu0 %75, %v57
  %v77 = vpop.permute.xlu0 %76
  %80 = vset.pattern.permute.xlu0 0
  %81 = vperm.xlu0 %80, %v58
  %v82 = vpop.permute.xlu0 %81
  %v84 = vadd.f32 %v49, %v62
  %v85 = vadd.f32 %v50, %v67
  %v86 = vadd.f32 %v51, %v72
  %v87 = vadd.f32 %v52, %v77
  %v88 = vadd.f32 %v53, %v82
  %v89 = vld [vmem:[%s0 + $0x1] sm:$0x1]
  %90 = vset.pattern.permute.xlu0 1
  %91 = vperm.xlu0 %90, %v14
  %v92 = vpop.permute.xlu0 %91
  %94 = vset.pattern.permute.xlu0 1
  %95 = vperm.xlu0 %94, %v15
  %v96 = vpop.permute.xlu0 %95
  %98 = vset.pattern.permute.xlu0 1
  %99 = vperm.xlu0 %98, %v16
  %v100 = vpop.permute.xlu0 %99
  %102 = vset.pattern.permute.xlu0 1
  %103 = vperm.xlu0 %102, %v17
  %v104 = vpop.permute.xlu0 %103
  %106 = vset.pattern.permute.xlu0 1
  %107 = vperm.xlu0 %106, %v18
  %v108 = vpop.permute.xlu0 %107
  %v110 = vlaneseq
  %v111 = vshrl.u32 %v110, 7
  %v112 = vsub.s32 0, %v111
  %v113 = vrot.slane %v89, %v112
  %v114 = vmul.f32 %v92, %v113
  %v115 = vmul.f32 %v96, %v113
  %v116 = vmul.f32 %v100, %v113
  %v117 = vmul.f32 %v104, %v113
  %v118 = vmul.f32 %v108, %v113
  %v119 = vadd.f32 %v84, %v114
  %v120 = vadd.f32 %v85, %v115
  %v121 = vadd.f32 %v86, %v116
  %v122 = vadd.f32 %v87, %v117
  %v123 = vadd.f32 %v88, %v118
  %v124 = vmul.f32 %v119, 0.20196398
  %v125 = vmul.f32 %v120, 0.20196398
  %v126 = vmul.f32 %v121, 0.20196398
  %v127 = vmul.f32 %v122, 0.20196398
  %v128 = vmul.f32 %v123, 0.20196398
  %v129 = verf.f32.pop %v124
  %v130 = verf.f32.pop %v125
  %v131 = verf.f32.pop %v126
  %v132 = verf.f32.pop %v127
  %v133 = verf.f32.pop %v128
  %v134 = vmul.f32 %v129, -0.13837998
  %v135 = vmul.f32 %v130, -0.13837998
  %v136 = vmul.f32 %v131, -0.13837998
  %v137 = vmul.f32 %v132, -0.13837998
  %v138 = vmul.f32 %v133, -0.13837998
  %v139 = vadd.f32 %v134, -0.36255214
  %v140 = vadd.f32 %v135, -0.36255214
  %v141 = vadd.f32 %v136, -0.36255214
  %v142 = vadd.f32 %v137, -0.36255214
  %v143 = vadd.f32 %v138, -0.36255214
  %v144 = vmul.f32 %v119, %v139
  %v145 = vmul.f32 %v120, %v140
  %v146 = vmul.f32 %v121, %v141
  %v147 = vmul.f32 %v122, %v142
  %v148 = vmul.f32 %v123, %v143
  %vm149 = vcmask 293888
  %150 = vst.msk [vmem:[%s3] sm:$0xff] %vm149, %v144
  %151 = vst.msk [vmem:[%s3 + $0x8] sm:$0xff] %vm149, %v145
  %152 = vst.msk [vmem:[%s3 + $0x10] sm:$0xff] %vm149, %v146
  %153 = vst.msk [vmem:[%s3 + $0x18] sm:$0xff] %vm149, %v147
  %vm154 = vcmask 288768
  %155 = vst.msk [vmem:[%s3 + $0x20] sm:$0x7] %vm154, %v148
  // Predicated region
  $region14: #{tpu_custom_call.1} parent=0 // pred_check
    _
  $region15: #{tpu_custom_call.1} parent=0 // pred_check_branch
    %157 = sbr.rel (0) target = $region17
  $region16: #{tpu_custom_call.1} parent=0 // pred_region
    _
  $region17: #{tpu_custom_call.1} parent=0 // pred_fallthru
    _
  // Predicated region
  $region18: #{tpu_custom_call.1} parent=0 // pred_check
    _
  $region19: #{tpu_custom_call.1} parent=0 // pred_check_branch
    %159 = sbr.rel (0) target = $region21
  $region20: #{tpu_custom_call.1} parent=0 // pred_region
    _
  $region21: #{tpu_custom_call.1} parent=0 // pred_fallthru
    _

</llo_original>
